<compile_context>
chip_gen: v6e
topology: v6e:2x2x1
jax: 0.10.0
libtpu: 0.0.40
codegen_flags: <defaults>
</compile_context>

<pallas_src>
import functools

import numpy as np
import jax
import jax.numpy as jnp
from jax import lax
from jax.experimental import pallas as pl
from jax.experimental.pallas import tpu as pltpu


def _round_up(x, m):
    return ((x + m - 1) // m) * m


# ---------------------------------------------------------------------------
# Optional pre-pass: positivity constraint applied exactly once over the weight
# (only used on the bf16 path with many M tiles; otherwise exp is fused below).
# ---------------------------------------------------------------------------
def _exp_weight_kernel(pw_ref, w_ref):
    w_ref[...] = jnp.exp(pw_ref[...].astype(jnp.float32)).astype(w_ref.dtype)


def _exp_weight(pre_weight_padded, tn, tk, out_dtype):
    Np, Kp = pre_weight_padded.shape
    return pl.pallas_call(
        _exp_weight_kernel,
        out_shape=jax.ShapeDtypeStruct((Np, Kp), out_dtype),
        grid_spec=pltpu.PrefetchScalarGridSpec(
            num_scalar_prefetch=0,
            grid=(Np // tn, Kp // tk),
            in_specs=[pl.BlockSpec((tn, tk), lambda j, k: (j, k))],
            out_specs=pl.BlockSpec((tn, tk), lambda j, k: (j, k)),
        ),
        compiler_params=pltpu.CompilerParams(
            dimension_semantics=("parallel", "parallel")),
    )(pre_weight_padded)


# ---------------------------------------------------------------------------
# Matmul + bias kernels.  grid = (M/tm, Out/tn, In/tk), K innermost.
# NT contraction (contract last dim of both operands) -> no in-kernel transpose.
# ---------------------------------------------------------------------------
def _mm_bias_direct_kernel(x_ref, w_ref, b_ref, o_ref, *, apply_exp):
    """f32 output path: accumulate directly into the VMEM-resident output tile."""
    w = w_ref[...]
    if apply_exp:
        w = jnp.exp(w.astype(jnp.float32))
    w = w.astype(x_ref.dtype)
    part = lax.dot_general(
        x_ref[...], w,
        dimension_numbers=(((1,), (1,)), ((), ())),
        preferred_element_type=jnp.float32)
    k = pl.program_id(2)

    @pl.when(k == 0)
    def _init():
        o_ref[...] = b_ref[...].astype(jnp.float32) + part

    @pl.when(k != 0)
    def _accum():
        o_ref[...] = o_ref[...] + part


def _mm_bias_acc_kernel(x_ref, w_ref, b_ref, o_ref, acc_ref, *, apply_exp):
    """Non-f32 output path: f32 scratch accumulator, cast on the last K step."""
    w = w_ref[...]
    if apply_exp:
        w = jnp.exp(w.astype(jnp.float32))
    w = w.astype(x_ref.dtype)
    part = lax.dot_general(
        x_ref[...], w,
        dimension_numbers=(((1,), (1,)), ((), ())),
        preferred_element_type=jnp.float32)
    k = pl.program_id(2)

    @pl.when(k == 0)
    def _init():
        acc_ref[...] = b_ref[...].astype(jnp.float32) + part

    @pl.when(k != 0)
    def _accum():
        acc_ref[...] += part

    @pl.when(k == pl.num_programs(2) - 1)
    def _finalize():
        o_ref[...] = acc_ref[...].astype(o_ref.dtype)


@functools.partial(jax.jit, static_argnames=("compute_dtype", "tm", "tn", "tk"))
def positive_linear(x, pre_weight, bias, weight=None, *, compute_dtype=jnp.float32,
                    tm=512, tn=1024, tk=512):
    """out = x @ exp(pre_weight).T + bias.

    x: (N, In), pre_weight: (Out, In), bias: (Out,) -> (N, Out) in x.dtype.

    compute_dtype: MXU input dtype. f32 is the exact default; bf16 is the
      throughput mode on all generations (f32 accumulation, ~0.4% element error).
    weight: optional pre-constrained weight exp(pre_weight) cached by the caller
      (serving path) -- skips the in-kernel exp entirely.
    """
    M, In = x.shape
    Out, In_w = pre_weight.shape
    assert In_w == In and bias.shape == (Out,)
    if weight is not None:
        assert weight.shape == (Out, In)

    cdt = jnp.dtype(compute_dtype)
    odt = jnp.dtype(x.dtype)
    m_align = 8 if cdt.itemsize >= 4 else 16   # bf16 sublane packing wants 16 rows

    # Clamp nominal tile sizes to the padded problem while respecting the
    # (sublane, 128) tiling constraints.
    tm_ = min(tm, _round_up(M, m_align))
    tn_ = min(tn, _round_up(Out, 128))
    tk_ = min(tk, _round_up(In, 128))
    Mp, Np, Kp = _round_up(M, tm_), _round_up(Out, tn_), _round_up(In, tk_)

    # Megacore (v7x, 2 TCs): guarantee >= 2 blocks along a "parallel" axis when
    # the (M, Out) grid would otherwise collapse to a single block.
    if (Mp // tm_) * (Np // tn_) == 1 and Np >= 256:
        tn_ = max(128, ((Np // 2) // 128) * 128)
        Np = _round_up(Out, tn_)

    m_blocks, n_blocks, k_blocks = Mp // tm_, Np // tn_, Kp // tk_

    # Zero-pad to tile multiples.  Padded K columns of x are zero, so the
    # exp(0)=1 entries of the padded weight contribute nothing; padded Out rows
    # only produce output columns sliced off below.  Out padded to a multiple
    # of 128 keeps the output slab lane-dense (unmasked stores).
    xp = jnp.pad(x, ((0, Mp - M), (0, Kp - In))).astype(compute_dtype)
    bp = jnp.pad(bias, (0, Np - Out)).astype(jnp.float32).reshape(1, Np)

    if weight is not None:
        # Caller-cached exp(pre_weight): no exp anywhere in the kernels.
        w_arr = jnp.pad(weight, ((0, Np - Out), (0, Kp - In))).astype(compute_dtype)
        apply_exp = False
    else:
        pwp = jnp.pad(pre_weight, ((0, Np - Out), (0, Kp - In)))
        if cdt == jnp.dtype(jnp.float32) or m_blocks <= 2:
            # Fused exp: EUP work hides under the MXU slot; saves a full HBM
            # round-trip on the weight.
            w_arr, apply_exp = pwp, True
        else:
            # bf16 path with many M tiles: hoist exp (and the bf16 downcast,
            # halving re-streamed weight bytes) into a single pre-pass.
            w_arr, apply_exp = _exp_weight(pwp, tn_, tk_, compute_dtype), False

    use_acc = odt != jnp.dtype(jnp.float32)
    wbytes = jnp.dtype(w_arr.dtype).itemsize

    # VMEM budget (double-buffered in/out + bias + optional accumulator),
    # capped so the biggest configs stay v7x-safe (64 MiB physical).
    footprint = (2 * tm_ * tk_ * cdt.itemsize
                 + 2 * tn_ * tk_ * wbytes
                 + 2 * tm_ * tn_ * odt.itemsize
                 + 2 * tn_ * 4
                 + (tm_ * tn_ * 4 if use_acc else 0))
    vmem_limit = int(min(48 * 1024 * 1024,
                         max(32 * 1024 * 1024, footprint + (4 << 20))))

    # HBM traffic including re-streaming (x once per Out tile, weight once per M tile).
    bytes_accessed = (Mp * Kp * cdt.itemsize * n_blocks
                      + Np * Kp * wbytes * m_blocks
                      + Np * 4 * m_blocks
                      + Mp * Np * odt.itemsize)
    transcendentals = Np * Kp * m_blocks if apply_exp else 0

    if use_acc:
        kernel = functools.partial(_mm_bias_acc_kernel, apply_exp=apply_exp)
        scratch = [pltpu.VMEM((tm_, tn_), jnp.float32)]
    else:
        kernel = functools.partial(_mm_bias_direct_kernel, apply_exp=apply_exp)
        scratch = []

    out_padded = pl.pallas_call(
        kernel,
        out_shape=jax.ShapeDtypeStruct((Mp, Np), odt),
        grid_spec=pltpu.PrefetchScalarGridSpec(
            num_scalar_prefetch=0,
            grid=(m_blocks, n_blocks, k_blocks),
            in_specs=[
                pl.BlockSpec((tm_, tk_), lambda i, j, k: (i, k)),  # x tile
                pl.BlockSpec((tn_, tk_), lambda i, j, k: (j, k)),  # weight tile (Out, In)
                pl.BlockSpec((1, tn_), lambda i, j, k: (0, j)),    # bias tile
            ],
            out_specs=pl.BlockSpec((tm_, tn_), lambda i, j, k: (i, j)),
            scratch_shapes=scratch,
        ),
        compiler_params=pltpu.CompilerParams(
            dimension_semantics=("parallel", "parallel", "arbitrary"),
            vmem_limit_bytes=vmem_limit),
        cost_estimate=pl.CostEstimate(
            flops=2 * Mp * Np * Kp,
            transcendentals=transcendentals,
            bytes_accessed=bytes_accessed),
    )(xp, w_arr, bp)

    return out_padded[:M, :Out]


def init_positive_linear_params(key, in_features, out_features, A_constraint="exp"):
    """Deterministic re-implementation of PositiveLinear.__init__ parameter init."""
    kw, kb = jax.random.split(key)
    pre_weight = jax.random.uniform(kw, (out_features, in_features), dtype=jnp.float32)
    if A_constraint == "exp":
        init_min, init_max = np.log(0.01), np.log(np.sqrt(1.0 / in_features))
    elif A_constraint == "clamp":
        init_min, init_max = 0.01, np.sqrt(1.0 / in_features)
    else:  # ''
        init_min, init_max = -np.sqrt(1.0 / in_features), np.sqrt(1.0 / in_features)
    pre_weight = pre_weight * (init_max - init_min) + init_min

    bias = jax.random.uniform(kb, (out_features,), dtype=jnp.float32)
    scale = 1.0 / in_features
    bias = bias * 2.0 * scale - scale
    return pre_weight, bias


# TODO(synk): non-default module configs (A_constraint in {'neg_exp','softmax','clamp',''}
# and b_constraint in {'tanh','tanh_conditional'}) are not implemented here; only the
# default 'exp' / '' forward path is translated.

if __name__ == "__main__":
    key = jax.random.PRNGKey(0)
    k_x, k_p, k_x2, k_p2 = jax.random.split(key, 4)

    # --- Test 1: tiny shape, exact f32 path (fused exp, single tile). ---
    batch, in_features, out_features = 8, 32, 16
    x = jax.random.normal(k_x, (batch, in_features), dtype=jnp.float32)
    pre_weight, bias = init_positive_linear_params(k_p, in_features, out_features, "exp")
    ref = x @ jnp.exp(pre_weight).T + bias
    out = jax.block_until_ready(positive_linear(x, pre_weight, bias))
    np.testing.assert_allclose(np.asarray(out), np.asarray(ref), rtol=1e-5, atol=1e-5)

    # --- Test 2: medium shape, f32 path (fused exp, multi-tile grid, K accumulation,
    #             megacore split on the Out axis). ---
    M2, In2, Out2 = 384, 640, 384
    x2 = jax.random.normal(k_x2, (M2, In2), dtype=jnp.float32)
    pw2, b2 = init_positive_linear_params(k_p2, In2, Out2, "exp")
    ref2 = x2 @ jnp.exp(pw2).T + b2
    out2 = jax.block_until_ready(positive_linear(x2, pw2, b2))
    np.testing.assert_allclose(np.asarray(out2), np.asarray(ref2), rtol=5e-3, atol=5e-3)

    # --- Test 3: caller-cached weight path (exp hoisted out of the call entirely). ---
    out2c = jax.block_until_ready(positive_linear(x2, pw2, b2, weight=jnp.exp(pw2)))
    np.testing.assert_allclose(np.asarray(out2c), np.asarray(ref2), rtol=5e-3, atol=5e-3)

    # --- Test 4: bf16 throughput path with bf16 input/output; small tm forces the
    #             exp pre-pass + f32 scratch-accumulator kernel. ---
    x2_bf16 = x2.astype(jnp.bfloat16)
    ref2_bf = x2_bf16.astype(jnp.float32) @ jnp.exp(pw2).T + b2
    out2_bf = jax.block_until_ready(
        positive_linear(x2_bf16, pw2, b2, compute_dtype=jnp.bfloat16, tm=128))
    np.testing.assert_allclose(np.asarray(out2_bf.astype(jnp.float32)),
                               np.asarray(ref2_bf), rtol=5e-2, atol=5e-2)

    print("KERNEL_OK")
</pallas_src>

<mosaic_0001>
module attributes {stable_mosaic.version = 11 : i64} {
  func.func @_mm_bias_direct_kernel(%arg0: i32, %arg1: i32, %arg2: i32, %arg3: memref<8x128xf32, #tpu.memory_space<vmem>>, %arg4: memref<128x128xf32, #tpu.memory_space<vmem>>, %arg5: memref<1x128xf32, #tpu.memory_space<vmem>>, %arg6: memref<8x128xf32, #tpu.memory_space<vmem>>) attributes {dimension_semantics = [#tpu.dimension_semantics<parallel>, #tpu.dimension_semantics<parallel>, #tpu.dimension_semantics<arbitrary>], iteration_bounds = array<i64: 1, 1, 1>, scalar_prefetch = 0 : i64, scratch_operands = 0 : i64, tpu.core_type = #tpu.core_type<tc>, window_params = [{transform_indices = @transform_0, window_bounds = array<i64: 8, 128>}, {transform_indices = @transform_1, window_bounds = array<i64: 128, 128>}, {transform_indices = @transform_2, window_bounds = array<i64: 1, 128>}, {transform_indices = @transform_3, window_bounds = array<i64: 8, 128>}]} {
    %c0 = arith.constant 0 : index
    %c0_0 = arith.constant 0 : index
    %0 = vector.load %arg4[%c0, %c0_0] : memref<128x128xf32, #tpu.memory_space<vmem>>, vector<128x128xf32>
    %1 = math.exp %0 : vector<128x128xf32>
    %c0_1 = arith.constant 0 : index
    %c0_2 = arith.constant 0 : index
    %2 = vector.load %arg3[%c0_1, %c0_2] : memref<8x128xf32, #tpu.memory_space<vmem>>, vector<8x128xf32>
    %cst = arith.constant dense<0.000000e+00> : vector<8x128xf32>
    %3 = tpu.matmul %2, %1, %cst {dimension_numbers = #tpu.dot_dimension_numbers<[1], [1], [0], [0], [0, 0, 1, 0], [], []>} : vector<8x128xf32>, vector<128x128xf32>, vector<8x128xf32> -> vector<8x128xf32>
    %c0_i32 = arith.constant 0 : i32
    %4 = arith.cmpi eq, %arg2, %c0_i32 : i32
    %5 = arith.extui %4 : i1 to i32
    %c0_i32_3 = arith.constant 0 : i32
    %6 = arith.cmpi ne, %5, %c0_i32_3 : i32
    scf.if %6 {
      %c0_6 = arith.constant 0 : index
      %c0_7 = arith.constant 0 : index
      %10 = vector.load %arg5[%c0_6, %c0_7] : memref<1x128xf32, #tpu.memory_space<vmem>>, vector<1x128xf32>
      %11 = vector.broadcast %10 : vector<1x128xf32> to vector<8x128xf32>
      %12 = arith.addf %11, %3 : vector<8x128xf32>
      %c0_8 = arith.constant 0 : index
      %c0_9 = arith.constant 0 : index
      %13 = vector.load %arg6[%c0_8, %c0_9] : memref<8x128xf32, #tpu.memory_space<vmem>>, vector<8x128xf32>
      tpu.vector_store %arg6[%c0_8, %c0_9], %12 {strides = array<i32>} : memref<8x128xf32, #tpu.memory_space<vmem>>, vector<8x128xf32>,
    } else {
    }
    %c0_i32_4 = arith.constant 0 : i32
    %7 = arith.cmpi ne, %arg2, %c0_i32_4 : i32
    %8 = arith.extui %7 : i1 to i32
    %c0_i32_5 = arith.constant 0 : i32
    %9 = arith.cmpi ne, %8, %c0_i32_5 : i32
    scf.if %9 {
      %c0_6 = arith.constant 0 : index
      %c0_7 = arith.constant 0 : index
      %10 = vector.load %arg6[%c0_6, %c0_7] : memref<8x128xf32, #tpu.memory_space<vmem>>, vector<8x128xf32>
      %11 = arith.addf %10, %3 : vector<8x128xf32>
      %c0_8 = arith.constant 0 : index
      %c0_9 = arith.constant 0 : index
      %12 = vector.load %arg6[%c0_8, %c0_9] : memref<8x128xf32, #tpu.memory_space<vmem>>, vector<8x128xf32>
      tpu.vector_store %arg6[%c0_8, %c0_9], %11 {strides = array<i32>} : memref<8x128xf32, #tpu.memory_space<vmem>>, vector<8x128xf32>,
    } else {
    }
    return
  }
  func.func @transform_0(%arg0: i32, %arg1: i32, %arg2: i32) -> (i32, i32) {
    %c0_i32 = arith.constant 0 : i32
    return %arg0, %arg2 : i32, i32
  }
  func.func @transform_1(%arg0: i32, %arg1: i32, %arg2: i32) -> (i32, i32) {
    %c0_i32 = arith.constant 0 : i32
    return %arg1, %arg2 : i32, i32
  }
  func.func @transform_2(%arg0: i32, %arg1: i32, %arg2: i32) -> (i32, i32) {
    %c0_i32 = arith.constant 0 : i32
    %c0_i32_0 = arith.constant 0 : i32
    return %c0_i32, %arg1 : i32, i32
  }
  func.func @transform_3(%arg0: i32, %arg1: i32, %arg2: i32) -> (i32, i32) {
    %c0_i32 = arith.constant 0 : i32
    return %arg0, %arg1 : i32, i32
  }
}

</mosaic_0001>

<llo_original>
// kernel: positive_linear.1
$region0: #{positive_linear.1}
  #allocation0 [shape = 'u32[]', space=smem, size = 0x4, offset = 0x4, fixed_abs, tag = 'smem constant byte address 0x4 - core index']
  #allocation1 [shape = 'u32[144,128]{1,0:T(1,128)}', space=vmem, size = 0x12000, scoped, tag = 'internal scratch']
  %s0 = inlined_call_operand.vmem [shape: f32[8,128], index: 0, kind: input, shape index: {}]
  %s1 = inlined_call_operand.vmem [shape: f32[128,128], index: 1, kind: input, shape index: {}]
  %s2 = inlined_call_operand.vmem [shape: f32[1,128], index: 2, kind: input, shape index: {}]
  %s3 = inlined_call_operand.hbm [shape: f32[8,128], index: 3, kind: output, shape index: {}]
  %s4 = sld [smem:[#allocation0]]
  $region30: #{positive_linear.1} parent=0
    _
  %s6 = ssub.s32 1, %s4
  %s7 = scalar_select 0, %s6, %s4
  $region1: #{positive_linear.1} parent=0
    #allocation2 [shape = 'u8[4096]{0}', space=vmem, size = 0x1000, scoped, tag = 'output window, operand 0, single buffered']
    #allocation3 [shape = 's32[1]{0}', space=sflag, size = 0x4, scoped, tag = 'scoped memory for positive_linear.1']
    %8 = vsyncpa [#allocation3], 0
    // Predicated region
    $region2: #{positive_linear.1} parent=1 // pred_check
      _
    $region3: #{positive_linear.1} parent=1 // pred_check_branch
      %10 = sbr.rel (0) target = $region5
    $region4: #{positive_linear.1} parent=1 // pred_region
      _
    $region5: #{positive_linear.1} parent=1 // pred_fallthru
      _
    // Predicated region
    $region6: #{positive_linear.1} parent=1 // pred_check
      _
    $region7: #{positive_linear.1} parent=1 // pred_check_branch
      %12 = sbr.rel (0) target = $region9
    $region8: #{positive_linear.1} parent=1 // pred_region
      _
    $region9: #{positive_linear.1} parent=1 // pred_fallthru
      _
    // Predicated region
    $region10: #{positive_linear.1} parent=1 // pred_check
      _
    $region11: #{positive_linear.1} parent=1 // pred_check_branch
      %14 = sbr.rel (0) target = $region13
    $region12: #{positive_linear.1} parent=1 // pred_region
      _
    $region13: #{positive_linear.1} parent=1 // pred_fallthru
      _
    %v15 = vld [vmem:[%s1] sm:$0xff]
    %v16 = vld [vmem:[%s1 + $0x8] sm:$0xff]
    %v17 = vld [vmem:[%s1 + $0x10] sm:$0xff]
    %v18 = vld [vmem:[%s1 + $0x18] sm:$0xff]
    %v19 = vld [vmem:[%s1 + $0x20] sm:$0xff]
    %v20 = vld [vmem:[%s1 + $0x28] sm:$0xff]
    %v21 = vld [vmem:[%s1 + $0x30] sm:$0xff]
    %v22 = vld [vmem:[%s1 + $0x38] sm:$0xff]
    %v23 = vld [vmem:[%s1 + $0x40] sm:$0xff]
    %v24 = vld [vmem:[%s1 + $0x48] sm:$0xff]
    %v25 = vld [vmem:[%s1 + $0x50] sm:$0xff]
    %v26 = vld [vmem:[%s1 + $0x58] sm:$0xff]
    %v27 = vld [vmem:[%s1 + $0x60] sm:$0xff]
    %v28 = vld [vmem:[%s1 + $0x68] sm:$0xff]
    %v29 = vld [vmem:[%s1 + $0x70] sm:$0xff]
    %v30 = vld [vmem:[%s1 + $0x78] sm:$0xff]
    %v31 = vmul.f32 %v15, 1.442695
    %v32 = vpow.pop %v31
    %v33 = vmul.f32 %v16, 1.442695
    %v34 = vpow.pop %v33
    %v35 = vmul.f32 %v17, 1.442695
    %v36 = vpow.pop %v35
    %v37 = vmul.f32 %v18, 1.442695
    %v38 = vpow.pop %v37
    %v39 = vmul.f32 %v19, 1.442695
    %v40 = vpow.pop %v39
    %v41 = vmul.f32 %v20, 1.442695
    %v42 = vpow.pop %v41
    %v43 = vmul.f32 %v21, 1.442695
    %v44 = vpow.pop %v43
    %v45 = vmul.f32 %v22, 1.442695
    %v46 = vpow.pop %v45
    %v47 = vmul.f32 %v23, 1.442695
    %v48 = vpow.pop %v47
    %v49 = vmul.f32 %v24, 1.442695
    %v50 = vpow.pop %v49
    %v51 = vmul.f32 %v25, 1.442695
    %v52 = vpow.pop %v51
    %v53 = vmul.f32 %v26, 1.442695
    %v54 = vpow.pop %v53
    %v55 = vmul.f32 %v27, 1.442695
    %v56 = vpow.pop %v55
    %v57 = vmul.f32 %v28, 1.442695
    %v58 = vpow.pop %v57
    %v59 = vmul.f32 %v29, 1.442695
    %v60 = vpow.pop %v59
    %v61 = vmul.f32 %v30, 1.442695
    %v62 = vpow.pop %v61
    %v63 = vld [vmem:[%s0] sm:$0xff]
    %64 = vmatprep.subr.mxu0 0.0
    %65 = vmatpush1.xpose.msra.mxu0 %v62
    %66 = vmatprep.subr.mxu0 0.0
    %67 = vmatpush1.xpose.msra.mxu0 %v60
    %68 = vmatprep.subr.mxu0 0.0
    %69 = vmatpush1.xpose.msra.mxu0 %v58
    %70 = vmatprep.subr.mxu0 0.0
    %71 = vmatpush1.xpose.msra.mxu0 %v56
    %72 = vmatprep.subr.mxu0 0.0
    %73 = vmatpush1.xpose.msra.mxu0 %v54
    %74 = vmatprep.subr.mxu0 0.0
    %75 = vmatpush1.xpose.msra.mxu0 %v52
    %76 = vmatprep.subr.mxu0 0.0
    %77 = vmatpush1.xpose.msra.mxu0 %v50
    %78 = vmatprep.subr.mxu0 0.0
    %79 = vmatpush1.xpose.msra.mxu0 %v48
    %80 = vmatprep.subr.mxu0 0.0
    %81 = vmatpush1.xpose.msra.mxu0 %v46
    %82 = vmatprep.subr.mxu0 0.0
    %83 = vmatpush1.xpose.msra.mxu0 %v44
    %84 = vmatprep.subr.mxu0 0.0
    %85 = vmatpush1.xpose.msra.mxu0 %v42
    %86 = vmatprep.subr.mxu0 0.0
    %87 = vmatpush1.xpose.msra.mxu0 %v40
    %88 = vmatprep.subr.mxu0 0.0
    %89 = vmatpush1.xpose.msra.mxu0 %v38
    %90 = vmatprep.subr.mxu0 0.0
    %91 = vmatpush1.xpose.msra.mxu0 %v36
    %92 = vmatprep.subr.mxu0 0.0
    %93 = vmatpush1.xpose.msra.mxu0 %v34
    %94 = vmatprep.subr.mxu0 0.0
    %95 = vmatpush1.xpose.msra.mxu0 %v32
    %96 = vmatprep.subr.mxu0 0.0
    %97 = vmatpush2.xpose.msra.mxu0 0.0
    %98 = vmatprep.subr.mxu0 0.0
    %99 = vmatpush2.xpose.msra.mxu0 0.0
    %100 = vmatprep.subr.mxu0 0.0
    %101 = vmatpush2.xpose.msra.mxu0 0.0
    %102 = vmatprep.subr.mxu0 0.0
    %103 = vmatpush2.xpose.msra.mxu0 0.0
    %104 = vmatprep.subr.mxu0 0.0
    %105 = vmatpush2.xpose.msra.mxu0 0.0
    %106 = vmatprep.subr.mxu0 0.0
    %107 = vmatpush2.xpose.msra.mxu0 0.0
    %108 = vmatprep.subr.mxu0 0.0
    %109 = vmatpush2.xpose.msra.mxu0 0.0
    %110 = vmatprep.subr.mxu0 0.0
    %111 = vmatpush2.xpose.msra.mxu0 0.0
    %112 = vmatprep.subr.mxu0 0.0
    %113 = vmatpush2.xpose.msra.mxu0 0.0
    %114 = vmatprep.subr.mxu0 0.0
    %115 = vmatpush2.xpose.msra.mxu0 0.0
    %116 = vmatprep.subr.mxu0 0.0
    %117 = vmatpush2.xpose.msra.mxu0 0.0
    %118 = vmatprep.subr.mxu0 0.0
    %119 = vmatpush2.xpose.msra.mxu0 0.0
    %120 = vmatprep.subr.mxu0 0.0
    %121 = vmatpush2.xpose.msra.mxu0 0.0
    %122 = vmatprep.subr.mxu0 0.0
    %123 = vmatpush2.xpose.msra.mxu0 0.0
    %124 = vmatprep.subr.mxu0 0.0
    %125 = vmatpush2.xpose.msra.mxu0 0.0
    %126 = vmatprep.subr.mxu0 0.0
    %127 = vmatpush2.xpose.msra.mxu0 0.0
    %128 = vmatprep.mubr.f32.mxu0 0.0
    %129 = vmatmul.mubr.f32.gmra.mxu0 %v63
    %v130 = vpop.f32.mrf.mxu0
    %v131 = vadd.f32 0.0, %v130
    %v132 = vpop.f32.mrf.mxu0
    %133 = vdwg.mxu0
    %p134 = scmp.eq.s32.totalorder 0, 0
    // Predicated region
    $region14: #{positive_linear.1} parent=1 // pred_check
      %p135 = pneg %p134
    $region15: #{positive_linear.1} parent=1 // pred_check_branch
      %137 = sbr.rel (%p135) target = $region17
    $region16: #{positive_linear.1} parent=1 // pred_region
      %v138 = vld [vmem:[%s2] sm:$0x1]
      %v140 = vlaneseq
      %v141 = vshrl.u32 %v140, 7
      %v142 = vsub.s32 0, %v141
      %v143 = vrot.slane %v138, %v142
      %v145 = vadd.f32 %v143, %v131
      %146 = vst [vmem:[#allocation2] sm:$0xff] %v145
    $region17: #{positive_linear.1} parent=1 // pred_fallthru
      _
    %p147 = scmp.ne.s32.totalorder 0, 0
    // Predicated region
    $region18: #{positive_linear.1} parent=1 // pred_check
      %p148 = pneg %p147
    $region19: #{positive_linear.1} parent=1 // pred_check_branch
      %150 = sbr.rel (%p148) target = $region21
    $region20: #{positive_linear.1} parent=1 // pred_region
      %v151 = vld [vmem:[#allocation2] sm:$0xff]
      %v152 = vadd.f32 %v151, %v131
      %153 = vst [vmem:[#allocation2] sm:$0xff] %v152
    $region21: #{positive_linear.1} parent=1 // pred_fallthru
      _
    // Predicated region
    $region22: #{positive_linear.1} parent=1 // pred_check
      _
    $region23: #{positive_linear.1} parent=1 // pred_check_branch
      %155 = sbr.rel (0) target = $region25
    $region24: #{positive_linear.1} parent=1 // pred_region
      %s157 = ssub.s32 128, 128
      %158 = vsyncadd [#allocation3], %s157
      %s160 = sshll.u32 [#allocation2], 4
      %s161 = int_to_ptr.vmem [resolvable:$true] %s160
      %163 = dma.vmem_to_hbm [thread:$0]  %s161, 128, %s3, [#allocation3]
    $region25: #{positive_linear.1} parent=1 // pred_fallthru
      _
    // Predicated region
    $region26: #{positive_linear.1} parent=1 // pred_check
      _
    $region27: #{positive_linear.1} parent=1 // pred_check_branch
      %165 = sbr.rel (0) target = $region29
    $region28: #{positive_linear.1} parent=1 // pred_region
      %166 = dma.done [#allocation3], 128
    $region29: #{positive_linear.1} parent=1 // pred_fallthru
      _
    %167 = vsyncpa [#allocation3], 1

</llo_original>
